<compile_context>
chip_gen: v7x
topology: tpu7x:2x2x1
jax: 0.10.0
libtpu: 0.0.40
codegen_flags: <defaults>
</compile_context>

<pallas_src>
import jax
import jax.numpy as jnp
from jax.experimental import pallas as pl
from jax.experimental.pallas import tpu as pltpu

IN_FEATURES = 2
OUT_FEATURES = 1


def linear_kernel(wb_ref, x_ref, o_ref):
    # wb_ref: SMEM (3,)        -> [w0, w1, b]
    # x_ref : VMEM (2, TB)     batch on the lane axis
    # o_ref : VMEM (1, TB)
    w0 = wb_ref[0]
    w1 = wb_ref[1]
    b = wb_ref[2]
    y = x_ref[0:1, :] * w0 + x_ref[1:2, :] * w1 + b
    o_ref[...] = y.astype(o_ref.dtype)


def simple_model_forward(x, weight, bias, *, tb=2048):
    """Forward pass of SimpleModel: y = x @ weight.T + bias.

    x:      (B, 2)  float32
    weight: (1, 2)  float32  (PyTorch nn.Linear layout: (out, in))
    bias:   (1,)    float32
    returns (B, 1)  float32
    """
    B = x.shape[0]

    # Lane tile: multiple of 128, no bigger than needed for small batches.
    tb = min(tb, max(128, pl.next_power_of_2(B)))
    tb = ((tb + 127) // 128) * 128
    Bp = pl.cdiv(B, tb) * tb

    # Layout plumbing (not compute): batch onto the lane axis, zero-pad.
    x_t = jnp.pad(x.T.astype(jnp.float32), ((0, 0), (0, Bp - B)))  # (2, Bp)
    # Params as 3 SMEM-resident scalars: [w0, w1, b].
    wb = jnp.concatenate(
        [weight.reshape(-1), bias.reshape(-1)]).astype(jnp.float32)  # (3,)

    grid = (Bp // tb,)

    out_t = pl.pallas_call(
        linear_kernel,
        out_shape=jax.ShapeDtypeStruct((OUT_FEATURES, Bp), jnp.float32),
        grid_spec=pl.GridSpec(
            grid=grid,
            in_specs=[
                # Params: whole (3,) array in SMEM, read as scalars in-kernel.
                pl.BlockSpec(memory_space=pltpu.MemorySpace.SMEM),
                # Inputs: lane-dense (2, tb) tiles over the batch axis.
                pl.BlockSpec((IN_FEATURES, tb), lambda i: (0, i)),
            ],
            out_specs=pl.BlockSpec((OUT_FEATURES, tb), lambda i: (0, i)),
        ),
        compiler_params=pltpu.CompilerParams(
            dimension_semantics=("parallel",),
        ),
        cost_estimate=pl.CostEstimate(
            flops=4 * B,                       # 2 mul + 2 add per row
            transcendentals=0,
            bytes_accessed=(x.size + B + 3) * 4,
        ),
    )(wb, x_t)

    # Back to the PyTorch-facing (B, 1) layout, dropping lane padding.
    return out_t[:, :B].T


if __name__ == "__main__":
    key = jax.random.PRNGKey(0)
    kx, kw, kb = jax.random.split(key, 3)

    # Small batch of 2-d points, as the module's Linear(2, 1) implies.
    B = 8
    x = jax.random.normal(kx, (B, IN_FEATURES), dtype=jnp.float32)

    # Deterministic parameter init matching nn.Linear's default:
    # uniform(-1/sqrt(in_features), 1/sqrt(in_features)).
    bound = 1.0 / jnp.sqrt(jnp.float32(IN_FEATURES))
    weight = jax.random.uniform(
        kw, (OUT_FEATURES, IN_FEATURES), dtype=jnp.float32,
        minval=-bound, maxval=bound)
    bias = jax.random.uniform(
        kb, (OUT_FEATURES,), dtype=jnp.float32, minval=-bound, maxval=bound)

    out = simple_model_forward(x, weight, bias)
    out = jax.block_until_ready(out)

    # Reference check against plain JAX.
    ref = x @ weight.T + bias
    assert out.shape == (B, OUT_FEATURES)
    assert jnp.allclose(out, ref, atol=1e-5, rtol=1e-5)

    print("KERNEL_OK")
</pallas_src>

<mosaic_0001>
module attributes {stable_mosaic.version = 11 : i64} {
  func.func @linear_kernel(%arg0: i32, %arg1: memref<3xf32, #tpu.memory_space<smem>>, %arg2: memref<2x128xf32, #tpu.memory_space<vmem>>, %arg3: memref<1x128xf32, #tpu.memory_space<vmem>>) attributes {dimension_semantics = [#tpu.dimension_semantics<parallel>], iteration_bounds = array<i64: 1>, scalar_prefetch = 0 : i64, scratch_operands = 0 : i64, tpu.core_type = #tpu.core_type<tc>, window_params = [{transform_indices = @transform_0, window_bounds = array<i64: 3>}, {transform_indices = @transform_1, window_bounds = array<i64: 2, 128>}, {transform_indices = @transform_2, window_bounds = array<i64: 1, 128>}]} {
    %c0 = arith.constant 0 : index
    %0 = memref.load %arg1[%c0] : memref<3xf32, #tpu.memory_space<smem>>
    %c1 = arith.constant 1 : index
    %1 = memref.load %arg1[%c1] : memref<3xf32, #tpu.memory_space<smem>>
    %c2 = arith.constant 2 : index
    %2 = memref.load %arg1[%c2] : memref<3xf32, #tpu.memory_space<smem>>
    %c0_0 = arith.constant 0 : index
    %c0_1 = arith.constant 0 : index
    %3 = vector.load %arg2[%c0_0, %c0_1] : memref<2x128xf32, #tpu.memory_space<vmem>>, vector<1x128xf32>
    %4 = vector.broadcast %0 : f32 to vector<1x128xf32>
    %5 = arith.mulf %3, %4 : vector<1x128xf32>
    %c1_2 = arith.constant 1 : index
    %c0_3 = arith.constant 0 : index
    %6 = vector.load %arg2[%c1_2, %c0_3] : memref<2x128xf32, #tpu.memory_space<vmem>>, vector<1x128xf32>
    %7 = vector.broadcast %1 : f32 to vector<1x128xf32>
    %8 = arith.mulf %6, %7 : vector<1x128xf32>
    %9 = arith.addf %5, %8 : vector<1x128xf32>
    %10 = vector.broadcast %2 : f32 to vector<1x128xf32>
    %11 = arith.addf %9, %10 : vector<1x128xf32>
    %c0_4 = arith.constant 0 : index
    %c0_5 = arith.constant 0 : index
    %12 = vector.load %arg3[%c0_4, %c0_5] : memref<1x128xf32, #tpu.memory_space<vmem>>, vector<1x128xf32>
    tpu.vector_store %arg3[%c0_4, %c0_5], %11 {strides = array<i32>} : memref<1x128xf32, #tpu.memory_space<vmem>>, vector<1x128xf32>,
    return
  }
  func.func @transform_0(%arg0: i32) -> i32 {
    %c0_i32 = arith.constant 0 : i32
    %c0_i32_0 = arith.constant 0 : i32
    return %c0_i32 : i32
  }
  func.func @transform_1(%arg0: i32) -> (i32, i32) {
    %c0_i32 = arith.constant 0 : i32
    %c0_i32_0 = arith.constant 0 : i32
    return %c0_i32, %arg0 : i32, i32
  }
  func.func @transform_2(%arg0: i32) -> (i32, i32) {
    %c0_i32 = arith.constant 0 : i32
    %c0_i32_0 = arith.constant 0 : i32
    return %c0_i32, %arg0 : i32, i32
  }
}

</mosaic_0001>

<llo_original>
// kernel: tpu_custom_call.1
$region0: #{tpu_custom_call.1}
  #allocation0 [shape = 'u32[]', space=smem, size = 0x4, offset = 0x4, fixed_abs, tag = 'smem constant byte address 0x4 - core index']
  #allocation1 [shape = 'u32[144,128]{1,0:T(1,128)}', space=vmem, size = 0x12000, scoped, tag = 'internal scratch']
  %s0 = inlined_call_operand.hbm [shape: f32[3], index: 0, kind: input, shape index: {}]
  %s1 = inlined_call_operand.vmem [shape: f32[2,128], index: 1, kind: input, shape index: {}]
  %s2 = inlined_call_operand.hbm [shape: f32[1,128], index: 2, kind: output, shape index: {}]
  %s3 = sld [smem:[#allocation0]]
  $region22: #{tpu_custom_call.1} parent=0
    _
  %s5 = ssub.s32 1, %s3
  %s6 = scalar_select 0, %s5, %s3
  $region1: #{tpu_custom_call.1} parent=0
    #allocation2 [shape = 'u8[512]{0}', space=smem, size = 0x200, scoped, tag = 'input window, operand 0, single buffered']
    #allocation3 [shape = 's32[1]{0}', space=sflag, size = 0x4, scoped, tag = 'scoped memory for tpu_custom_call.1']
    #allocation4 [shape = 's32[1]{0}', space=sflag, size = 0x4, scoped, tag = 'scoped memory for tpu_custom_call.1']
    #allocation5 [shape = 'u8[512]{0}', space=vmem, size = 0x400, scoped, tag = 'output window, operand 0, single buffered']
    %7 = vsyncpa [#allocation4], 0
    %8 = vsyncpa [#allocation3], 0
    // Predicated region
    $region2: #{tpu_custom_call.1} parent=1 // pred_check
      _
    $region3: #{tpu_custom_call.1} parent=1 // pred_check_branch
      %10 = sbr.rel (0) target = $region5
    $region4: #{tpu_custom_call.1} parent=1 // pred_region
      %s12 = ssub.s32 16, 16
      %13 = vsyncadd [#allocation4], %s12
      %16 = dma.hbm_to_smem %s0, 16, [#allocation2], [#allocation4]
    $region5: #{tpu_custom_call.1} parent=1 // pred_fallthru
      _
    // Predicated region
    $region6: #{tpu_custom_call.1} parent=1 // pred_check
      _
    $region7: #{tpu_custom_call.1} parent=1 // pred_check_branch
      %18 = sbr.rel (0) target = $region9
    $region8: #{tpu_custom_call.1} parent=1 // pred_region
      _
    $region9: #{tpu_custom_call.1} parent=1 // pred_fallthru
      _
    // Predicated region
    $region10: #{tpu_custom_call.1} parent=1 // pred_check
      _
    $region11: #{tpu_custom_call.1} parent=1 // pred_check_branch
      %20 = sbr.rel (0) target = $region13
    $region12: #{tpu_custom_call.1} parent=1 // pred_region
      %21 = dma.done [#allocation4], 16
    $region13: #{tpu_custom_call.1} parent=1 // pred_fallthru
      _
    %22 = sfence
    %s23 = sld [smem:[#allocation2]]
    %s24 = sld [smem:[#allocation2 + $0x1]]
    %s25 = sld [smem:[#allocation2 + $0x2]]
    %v26 = vld [vmem:[%s1] sm:$0x1]
    %v27 = vstv %s23
    %v28 = vmul.f32 %v26, %v27
    %v29 = vld [vmem:[%s1 + $0x1] sm:$0x1]
    %v30 = vstv %s24
    %v31 = vmul.f32 %v29, %v30
    %v32 = vadd.f32 %v28, %v31
    %v33 = vstv %s25
    %v34 = vadd.f32 %v32, %v33
    %35 = vst [vmem:[#allocation5] sm:$0x1] %v34
    // Predicated region
    $region14: #{tpu_custom_call.1} parent=1 // pred_check
      _
    $region15: #{tpu_custom_call.1} parent=1 // pred_check_branch
      %37 = sbr.rel (0) target = $region17
    $region16: #{tpu_custom_call.1} parent=1 // pred_region
      %s39 = ssub.s32 16, 16
      %40 = vsyncadd [#allocation3], %s39
      %s42 = sshll.u32 [#allocation5], 4
      %s43 = int_to_ptr.vmem [resolvable:$true] %s42
      %45 = dma.vmem_to_hbm [thread:$0]  %s43, 16, %s2, [#allocation3]
    $region17: #{tpu_custom_call.1} parent=1 // pred_fallthru
      _
    // Predicated region
    $region18: #{tpu_custom_call.1} parent=1 // pred_check
      _
    $region19: #{tpu_custom_call.1} parent=1 // pred_check_branch
      %47 = sbr.rel (0) target = $region21
    $region20: #{tpu_custom_call.1} parent=1 // pred_region
      %48 = dma.done [#allocation3], 16
    $region21: #{tpu_custom_call.1} parent=1 // pred_fallthru
      _
    %49 = vsyncpa [#allocation3], 1
    %50 = vsyncpa [#allocation4], 1

</llo_original>
